<compile_context>
chip_gen: v7x
topology: tpu7x:2x2x1
jax: 0.10.0
libtpu: 0.0.40
codegen_flags: <defaults>
</compile_context>

<pallas_src>
import jax
import jax.numpy as jnp
from jax.experimental import pallas as pl
from jax.experimental.pallas import tpu as pltpu

LANE = 128


def metricnet_kernel(x_ref,
                     w1_ref, w2_ref, w3_ref, w4_ref,
                     b_ref,
                     o_ref):
    """Whole MLP forward for the full batch, fully resident in VMEM.

    Weights are bf16; dots accumulate in f32 (preferred_element_type).
    Bias-add / ReLU stay in f32 (VPU path, safe on v5e).
    """
    x = x_ref[...].astype(jnp.bfloat16)
    b = b_ref[...]                      # (4, 128) f32, rows = b1,b2,b3,b4(padded)

    ld = w1_ref.shape[1]                # layer_dim (static)
    no = w4_ref.shape[1]                # padded num_class (static)

    h = jnp.dot(x, w1_ref[...], preferred_element_type=jnp.float32) + b[0:1, :ld]
    h = jnp.maximum(h, 0.0)

    h = jnp.dot(h.astype(jnp.bfloat16), w2_ref[...],
                preferred_element_type=jnp.float32) + b[1:2, :ld]
    h = jnp.maximum(h, 0.0)

    h = jnp.dot(h.astype(jnp.bfloat16), w3_ref[...],
                preferred_element_type=jnp.float32) + b[2:3, :ld]
    h = jnp.maximum(h, 0.0)

    out = jnp.dot(h.astype(jnp.bfloat16), w4_ref[...],
                  preferred_element_type=jnp.float32) + b[3:4, :no]
    o_ref[...] = out.astype(o_ref.dtype)


def metricnet_forward(x, params):
    """x: [B, feature_dim] float32.  params: dict of (w, b) per layer, w is [in, out].

    Single-step grid: the whole batch + all weights live in VMEM at once.
    For much larger B, tile the batch along a "parallel" grid axis instead
    (keeps both TensorCores busy on v7x); at B=64 latency dominates, so one
    tile is the right call.
    """
    B, feat = x.shape
    w1, b1 = params["fc1"]
    w2, b2 = params["fc2"]
    w3, b3 = params["fc3"]
    w4, b4 = params["out"]
    layer_dim = w1.shape[1]
    num_class = w4.shape[1]

    # Pad the final layer to a full 128-lane output (lane-dense stores; the
    # MXU pads internally anyway, so this is free).
    pad_out = ((num_class + LANE - 1) // LANE) * LANE
    w4p = jnp.pad(w4, ((0, 0), (0, pad_out - num_class)))
    b4p = jnp.pad(b4, ((0, 0), (0, pad_out - num_class)))

    # Stack all biases into one (4, bw) f32 operand (single DMA / VMEM slab).
    bw = max(layer_dim, pad_out)

    def pad_bias(b):
        return jnp.pad(b, ((0, 0), (0, bw - b.shape[1])))

    biases = jnp.concatenate(
        [pad_bias(b1), pad_bias(b2), pad_bias(b3), pad_bias(b4p)], axis=0
    ).astype(jnp.float32)                                   # (4, bw)

    # Ship matmul weights as bf16 (halves weight DMA bytes; MXU-native rate).
    w1b = w1.astype(jnp.bfloat16)
    w2b = w2.astype(jnp.bfloat16)
    w3b = w3.astype(jnp.bfloat16)
    w4b = w4p.astype(jnp.bfloat16)

    def full_spec(shape):
        return pl.BlockSpec(shape, lambda i: (0, 0))

    out_padded = pl.pallas_call(
        metricnet_kernel,
        out_shape=jax.ShapeDtypeStruct((B, pad_out), jnp.float32),
        grid_spec=pltpu.PrefetchScalarGridSpec(
            num_scalar_prefetch=0,
            grid=(1,),                                       # collapsed grid
            in_specs=[
                full_spec((B, feat)),                        # x (whole batch)
                full_spec((feat, layer_dim)),                # w1 (bf16)
                full_spec((layer_dim, layer_dim)),           # w2 (bf16)
                full_spec((layer_dim, layer_dim)),           # w3 (bf16)
                full_spec((layer_dim, pad_out)),             # w4 padded (bf16)
                full_spec((4, bw)),                          # stacked biases (f32)
            ],
            out_specs=full_spec((B, pad_out)),
        ),
        compiler_params=pltpu.CompilerParams(
            dimension_semantics=("arbitrary",),
        ),
    )(x, w1b, w2b, w3b, w4b, biases)

    return out_padded[:, :num_class]


def init_metricnet_params(key, feature_dim=256, num_class=16):
    """Deterministic synthetic init mirroring MetricNet.__init__ shapes.

    PyTorch Linear weight is [out, in]; we store the transpose [in, out].
    out_layer: normal(std=0.001) weight, zero bias (as in the module).
    """
    if feature_dim == 384 or feature_dim == 512:
        layer_dim = 128
    elif feature_dim <= 16:
        layer_dim = 4
        # TODO(synk): the feature_dim<=16 branch hard-codes a 4x8 fc1 weight in
        # the PyTorch module; not exercised here (we use feature_dim=256).
    else:
        layer_dim = int(feature_dim / 2)

    k1, k2, k3, k4, kb1, kb2, kb3 = jax.random.split(key, 7)

    def linear_init(kw, kb, fan_in, fan_out):
        bound = 1.0 / jnp.sqrt(fan_in)
        w = jax.random.uniform(kw, (fan_in, fan_out), jnp.float32, -bound, bound)
        b = jax.random.uniform(kb, (1, fan_out), jnp.float32, -bound, bound)
        return w, b

    fc1 = linear_init(k1, kb1, feature_dim, layer_dim)
    fc2 = linear_init(k2, kb2, layer_dim, layer_dim)
    fc3 = linear_init(k3, kb3, layer_dim, layer_dim)
    w_out = 0.001 * jax.random.normal(k4, (layer_dim, num_class), jnp.float32)
    b_out = jnp.zeros((1, num_class), jnp.float32)

    return {"fc1": fc1, "fc2": fc2, "fc3": fc3, "out": (w_out, b_out)}, layer_dim


def metricnet_ref_f32(x, params):
    """Pure-JAX f32 reference of the forward pass."""
    w1, b1 = params["fc1"]
    w2, b2 = params["fc2"]
    w3, b3 = params["fc3"]
    w4, b4 = params["out"]
    h = jnp.maximum(x @ w1 + b1, 0.0)
    h = jnp.maximum(h @ w2 + b2, 0.0)
    h = jnp.maximum(h @ w3 + b3, 0.0)
    return h @ w4 + b4


def metricnet_ref_bf16(x, params):
    """Pure-JAX reference matching the kernel's bf16-input / f32-accumulate dots."""
    def dotb(a, w):
        return jnp.dot(a.astype(jnp.bfloat16), w.astype(jnp.bfloat16),
                       preferred_element_type=jnp.float32)
    w1, b1 = params["fc1"]
    w2, b2 = params["fc2"]
    w3, b3 = params["fc3"]
    w4, b4 = params["out"]
    h = jnp.maximum(dotb(x, w1) + b1, 0.0)
    h = jnp.maximum(dotb(h, w2) + b2, 0.0)
    h = jnp.maximum(dotb(h, w3) + b3, 0.0)
    return dotb(h, w4) + b4


if __name__ == "__main__":
    key = jax.random.PRNGKey(0)
    k_params, k_x = jax.random.split(key)

    B, feature_dim, num_class = 64, 256, 16
    params, layer_dim = init_metricnet_params(k_params, feature_dim, num_class)

    x = jax.random.normal(k_x, (B, feature_dim), jnp.float32)

    out = metricnet_forward(x, params)
    out = jax.block_until_ready(out)
    assert out.shape == (B, num_class)

    # Correctness: match the bf16-input/f32-accumulate reference tightly, and
    # the full-f32 reference loosely (bf16 matmul inputs cost a little precision).
    ref_bf16 = metricnet_ref_bf16(x, params)
    ref_f32 = metricnet_ref_f32(x, params)
    assert jnp.allclose(out, ref_bf16, atol=2e-3, rtol=1e-2), "mismatch vs. bf16 reference"
    assert jnp.allclose(out, ref_f32, atol=1e-2, rtol=5e-2), "mismatch vs. f32 reference"

    print("KERNEL_OK")
</pallas_src>

<mosaic_0001>
module attributes {stable_mosaic.version = 11 : i64} {
  func.func @metricnet_kernel(%arg0: i32, %arg1: memref<64x256xf32, #tpu.memory_space<vmem>>, %arg2: memref<256x128xbf16, #tpu.memory_space<vmem>>, %arg3: memref<128x128xbf16, #tpu.memory_space<vmem>>, %arg4: memref<128x128xbf16, #tpu.memory_space<vmem>>, %arg5: memref<128x128xbf16, #tpu.memory_space<vmem>>, %arg6: memref<4x128xf32, #tpu.memory_space<vmem>>, %arg7: memref<64x128xf32, #tpu.memory_space<vmem>>) attributes {dimension_semantics = [#tpu.dimension_semantics<arbitrary>], iteration_bounds = array<i64: 1>, scalar_prefetch = 0 : i64, scratch_operands = 0 : i64, tpu.core_type = #tpu.core_type<tc>, window_params = [{pipeline_mode = #tpu.pipeline_mode<synchronous>, transform_indices = @transform_0, window_bounds = array<i64: 64, 256>}, {pipeline_mode = #tpu.pipeline_mode<synchronous>, transform_indices = @transform_1, window_bounds = array<i64: 256, 128>}, {pipeline_mode = #tpu.pipeline_mode<synchronous>, transform_indices = @transform_2, window_bounds = array<i64: 128, 128>}, {pipeline_mode = #tpu.pipeline_mode<synchronous>, transform_indices = @transform_3, window_bounds = array<i64: 128, 128>}, {pipeline_mode = #tpu.pipeline_mode<synchronous>, transform_indices = @transform_4, window_bounds = array<i64: 128, 128>}, {pipeline_mode = #tpu.pipeline_mode<synchronous>, transform_indices = @transform_5, window_bounds = array<i64: 4, 128>}, {pipeline_mode = #tpu.pipeline_mode<synchronous>, transform_indices = @transform_6, window_bounds = array<i64: 64, 128>}]} {
    %c0 = arith.constant 0 : index
    %c0_0 = arith.constant 0 : index
    %0 = vector.load %arg1[%c0, %c0_0] : memref<64x256xf32, #tpu.memory_space<vmem>>, vector<64x256xf32>
    %1 = arith.truncf %0 : vector<64x256xf32> to vector<64x256xbf16>
    %c0_1 = arith.constant 0 : index
    %c0_2 = arith.constant 0 : index
    %2 = vector.load %arg6[%c0_1, %c0_2] : memref<4x128xf32, #tpu.memory_space<vmem>>, vector<4x128xf32>
    %c0_3 = arith.constant 0 : index
    %c0_4 = arith.constant 0 : index
    %3 = vector.load %arg2[%c0_3, %c0_4] : memref<256x128xbf16, #tpu.memory_space<vmem>>, vector<256x128xbf16>
    %cst = arith.constant dense<0.000000e+00> : vector<64x128xf32>
    %4 = tpu.matmul %1, %3, %cst {dimension_numbers = #tpu.dot_dimension_numbers<[1], [0], [0], [1], [0, 0, 1, 1], [], []>} : vector<64x256xbf16>, vector<256x128xbf16>, vector<64x128xf32> -> vector<64x128xf32>
    %5 = vector.extract_strided_slice %2 {offsets = [0, 0], sizes = [1, 128], strides = [1, 1]} : vector<4x128xf32> to vector<1x128xf32>
    %6 = vector.broadcast %5 : vector<1x128xf32> to vector<64x128xf32>
    %7 = arith.addf %4, %6 : vector<64x128xf32>
    %cst_5 = arith.constant 0.000000e+00 : f32
    %8 = vector.broadcast %cst_5 : f32 to vector<64x128xf32>
    %9 = arith.maximumf %7, %8 : vector<64x128xf32>
    %10 = arith.truncf %9 : vector<64x128xf32> to vector<64x128xbf16>
    %c0_6 = arith.constant 0 : index
    %c0_7 = arith.constant 0 : index
    %11 = vector.load %arg3[%c0_6, %c0_7] : memref<128x128xbf16, #tpu.memory_space<vmem>>, vector<128x128xbf16>
    %cst_8 = arith.constant dense<0.000000e+00> : vector<64x128xf32>
    %12 = tpu.matmul %10, %11, %cst_8 {dimension_numbers = #tpu.dot_dimension_numbers<[1], [0], [0], [1], [0, 0, 1, 1], [], []>} : vector<64x128xbf16>, vector<128x128xbf16>, vector<64x128xf32> -> vector<64x128xf32>
    %13 = vector.extract_strided_slice %2 {offsets = [1, 0], sizes = [1, 128], strides = [1, 1]} : vector<4x128xf32> to vector<1x128xf32>
    %14 = vector.broadcast %13 : vector<1x128xf32> to vector<64x128xf32>
    %15 = arith.addf %12, %14 : vector<64x128xf32>
    %cst_9 = arith.constant 0.000000e+00 : f32
    %16 = vector.broadcast %cst_9 : f32 to vector<64x128xf32>
    %17 = arith.maximumf %15, %16 : vector<64x128xf32>
    %18 = arith.truncf %17 : vector<64x128xf32> to vector<64x128xbf16>
    %c0_10 = arith.constant 0 : index
    %c0_11 = arith.constant 0 : index
    %19 = vector.load %arg4[%c0_10, %c0_11] : memref<128x128xbf16, #tpu.memory_space<vmem>>, vector<128x128xbf16>
    %cst_12 = arith.constant dense<0.000000e+00> : vector<64x128xf32>
    %20 = tpu.matmul %18, %19, %cst_12 {dimension_numbers = #tpu.dot_dimension_numbers<[1], [0], [0], [1], [0, 0, 1, 1], [], []>} : vector<64x128xbf16>, vector<128x128xbf16>, vector<64x128xf32> -> vector<64x128xf32>
    %21 = vector.extract_strided_slice %2 {offsets = [2, 0], sizes = [1, 128], strides = [1, 1]} : vector<4x128xf32> to vector<1x128xf32>
    %22 = vector.broadcast %21 : vector<1x128xf32> to vector<64x128xf32>
    %23 = arith.addf %20, %22 : vector<64x128xf32>
    %cst_13 = arith.constant 0.000000e+00 : f32
    %24 = vector.broadcast %cst_13 : f32 to vector<64x128xf32>
    %25 = arith.maximumf %23, %24 : vector<64x128xf32>
    %26 = arith.truncf %25 : vector<64x128xf32> to vector<64x128xbf16>
    %c0_14 = arith.constant 0 : index
    %c0_15 = arith.constant 0 : index
    %27 = vector.load %arg5[%c0_14, %c0_15] : memref<128x128xbf16, #tpu.memory_space<vmem>>, vector<128x128xbf16>
    %cst_16 = arith.constant dense<0.000000e+00> : vector<64x128xf32>
    %28 = tpu.matmul %26, %27, %cst_16 {dimension_numbers = #tpu.dot_dimension_numbers<[1], [0], [0], [1], [0, 0, 1, 1], [], []>} : vector<64x128xbf16>, vector<128x128xbf16>, vector<64x128xf32> -> vector<64x128xf32>
    %29 = vector.extract_strided_slice %2 {offsets = [3, 0], sizes = [1, 128], strides = [1, 1]} : vector<4x128xf32> to vector<1x128xf32>
    %30 = vector.broadcast %29 : vector<1x128xf32> to vector<64x128xf32>
    %31 = arith.addf %28, %30 : vector<64x128xf32>
    %c0_17 = arith.constant 0 : index
    %c0_18 = arith.constant 0 : index
    %32 = vector.load %arg7[%c0_17, %c0_18] : memref<64x128xf32, #tpu.memory_space<vmem>>, vector<64x128xf32>
    tpu.vector_store %arg7[%c0_17, %c0_18], %31 {strides = array<i32>} : memref<64x128xf32, #tpu.memory_space<vmem>>, vector<64x128xf32>,
    return
  }
  func.func @transform_0(%arg0: i32) -> (i32, i32) {
    %c0_i32 = arith.constant 0 : i32
    %c0_i32_0 = arith.constant 0 : i32
    %c0_i32_1 = arith.constant 0 : i32
    return %c0_i32, %c0_i32_0 : i32, i32
  }
  func.func @transform_1(%arg0: i32) -> (i32, i32) {
    %c0_i32 = arith.constant 0 : i32
    %c0_i32_0 = arith.constant 0 : i32
    %c0_i32_1 = arith.constant 0 : i32
    return %c0_i32, %c0_i32_0 : i32, i32
  }
  func.func @transform_2(%arg0: i32) -> (i32, i32) {
    %c0_i32 = arith.constant 0 : i32
    %c0_i32_0 = arith.constant 0 : i32
    %c0_i32_1 = arith.constant 0 : i32
    return %c0_i32, %c0_i32_0 : i32, i32
  }
  func.func @transform_3(%arg0: i32) -> (i32, i32) {
    %c0_i32 = arith.constant 0 : i32
    %c0_i32_0 = arith.constant 0 : i32
    %c0_i32_1 = arith.constant 0 : i32
    return %c0_i32, %c0_i32_0 : i32, i32
  }
  func.func @transform_4(%arg0: i32) -> (i32, i32) {
    %c0_i32 = arith.constant 0 : i32
    %c0_i32_0 = arith.constant 0 : i32
    %c0_i32_1 = arith.constant 0 : i32
    return %c0_i32, %c0_i32_0 : i32, i32
  }
  func.func @transform_5(%arg0: i32) -> (i32, i32) {
    %c0_i32 = arith.constant 0 : i32
    %c0_i32_0 = arith.constant 0 : i32
    %c0_i32_1 = arith.constant 0 : i32
    return %c0_i32, %c0_i32_0 : i32, i32
  }
  func.func @transform_6(%arg0: i32) -> (i32, i32) {
    %c0_i32 = arith.constant 0 : i32
    %c0_i32_0 = arith.constant 0 : i32
    %c0_i32_1 = arith.constant 0 : i32
    return %c0_i32, %c0_i32_0 : i32, i32
  }
}

</mosaic_0001>

<llo_original>
// kernel: tpu_custom_call.1
$region0: #{tpu_custom_call.1}
  #allocation0 [shape = 'u32[]', space=smem, size = 0x4, offset = 0x4, fixed_abs, tag = 'smem constant byte address 0x4 - core index']
  #allocation1 [shape = 'u32[144,128]{1,0:T(1,128)}', space=vmem, size = 0x12000, scoped, tag = 'internal scratch']
  %s0 = inlined_call_operand.hbm [shape: f32[64,256], index: 0, kind: input, shape index: {}]
  %s1 = inlined_call_operand.hbm [shape: bf16[256,128], index: 1, kind: input, shape index: {}]
  %s2 = inlined_call_operand.hbm [shape: bf16[128,128], index: 2, kind: input, shape index: {}]
  %s3 = inlined_call_operand.hbm [shape: bf16[128,128], index: 3, kind: input, shape index: {}]
  %s4 = inlined_call_operand.hbm [shape: bf16[128,128], index: 4, kind: input, shape index: {}]
  %s5 = inlined_call_operand.vmem [shape: f32[4,128], index: 5, kind: input, shape index: {}]
  %s6 = inlined_call_operand.hbm [shape: f32[64,128], index: 6, kind: output, shape index: {}]
  %s7 = sld [smem:[#allocation0]]
  $region54: #{tpu_custom_call.1} parent=0
    _
  %s9 = ssub.s32 1, %s7
  %s10 = scalar_select 0, %s9, %s7
  $region1: #{tpu_custom_call.1} parent=0
    #allocation2 [shape = 'u8[65536]{0}', space=vmem, size = 0x10000, scoped, tag = 'input window, operand 0, single buffered']
    #allocation3 [shape = 's32[1]{0}', space=sflag, size = 0x4, scoped, tag = 'scoped memory for tpu_custom_call.1']
    #allocation4 [shape = 's32[1]{0}', space=sflag, size = 0x4, scoped, tag = 'scoped memory for tpu_custom_call.1']
    #allocation5 [shape = 'u8[65536]{0}', space=vmem, size = 0x10000, scoped, tag = 'input window, operand 1, single buffered']
    #allocation6 [shape = 's32[1]{0}', space=sflag, size = 0x4, scoped, tag = 'scoped memory for tpu_custom_call.1']
    #allocation7 [shape = 'u8[32768]{0}', space=vmem, size = 0x8000, scoped, tag = 'input window, operand 2, single buffered']
    #allocation8 [shape = 'u8[32768]{0}', space=vmem, size = 0x8000, scoped, tag = 'input window, operand 3, single buffered']
    #allocation9 [shape = 's32[1]{0}', space=sflag, size = 0x4, scoped, tag = 'scoped memory for tpu_custom_call.1']
    #allocation10 [shape = 'u8[32768]{0}', space=vmem, size = 0x8000, scoped, tag = 'input window, operand 4, single buffered']
    #allocation11 [shape = 'u8[32768]{0}', space=vmem, size = 0x8000, scoped, tag = 'output window, operand 0, single buffered']
    %11 = vsyncpa [#allocation3], 0
    %12 = vsyncpa [#allocation6], 0
    %13 = vsyncpa [#allocation9], 0
    %14 = vsyncpa [#allocation4], 0
    // Predicated region
    $region2: #{tpu_custom_call.1} parent=1 // pred_check
      _
    $region3: #{tpu_custom_call.1} parent=1 // pred_check_branch
      %16 = sbr.rel (0) target = $region5
    $region4: #{tpu_custom_call.1} parent=1 // pred_region
      %s18 = ssub.s32 2048, 2048
      %19 = vsyncadd [#allocation3], %s18
      %s20 = sshll.u32 [#allocation2], 4
      %s21 = int_to_ptr.vmem [resolvable:$true] %s20
      %26 = dma.hbm_to_vmem [thread:$0]  %s0, 2048, %s21, [#allocation3], 256, 256, 16
    $region5: #{tpu_custom_call.1} parent=1 // pred_fallthru
      _
    // Predicated region
    $region6: #{tpu_custom_call.1} parent=1 // pred_check
      _
    $region7: #{tpu_custom_call.1} parent=1 // pred_check_branch
      %28 = sbr.rel (0) target = $region9
    $region8: #{tpu_custom_call.1} parent=1 // pred_region
      %s30 = ssub.s32 2048, 2048
      %31 = vsyncadd [#allocation6], %s30
      %s32 = sshll.u32 [#allocation5], 4
      %s33 = int_to_ptr.vmem [resolvable:$true] %s32
      %38 = dma.hbm_to_vmem [thread:$0]  %s1, 2048, %s33, [#allocation6], 64, 64, 4
    $region9: #{tpu_custom_call.1} parent=1 // pred_fallthru
      _
    // Predicated region
    $region10: #{tpu_custom_call.1} parent=1 // pred_check
      _
    $region11: #{tpu_custom_call.1} parent=1 // pred_check_branch
      %40 = sbr.rel (0) target = $region13
    $region12: #{tpu_custom_call.1} parent=1 // pred_region
      %s42 = ssub.s32 1024, 1024
      %43 = vsyncadd [#allocation6], %s42
      %s44 = sshll.u32 [#allocation7], 4
      %s45 = int_to_ptr.vmem [resolvable:$true] %s44
      %50 = dma.hbm_to_vmem [thread:$0]  %s2, 1024, %s45, [#allocation6], 64, 64, 4
    $region13: #{tpu_custom_call.1} parent=1 // pred_fallthru
      _
    // Predicated region
    $region14: #{tpu_custom_call.1} parent=1 // pred_check
      _
    $region15: #{tpu_custom_call.1} parent=1 // pred_check_branch
      %52 = sbr.rel (0) target = $region17
    $region16: #{tpu_custom_call.1} parent=1 // pred_region
      %s54 = ssub.s32 1024, 1024
      %55 = vsyncadd [#allocation9], %s54
      %s56 = sshll.u32 [#allocation8], 4
      %s57 = int_to_ptr.vmem [resolvable:$true] %s56
      %62 = dma.hbm_to_vmem [thread:$0]  %s3, 1024, %s57, [#allocation9], 64, 64, 4
    $region17: #{tpu_custom_call.1} parent=1 // pred_fallthru
      _
    // Predicated region
    $region18: #{tpu_custom_call.1} parent=1 // pred_check
      _
    $region19: #{tpu_custom_call.1} parent=1 // pred_check_branch
      %64 = sbr.rel (0) target = $region21
    $region20: #{tpu_custom_call.1} parent=1 // pred_region
      %s66 = ssub.s32 1024, 1024
      %67 = vsyncadd [#allocation9], %s66
      %s68 = sshll.u32 [#allocation10], 4
      %s69 = int_to_ptr.vmem [resolvable:$true] %s68
      %74 = dma.hbm_to_vmem [thread:$0]  %s4, 1024, %s69, [#allocation9], 64, 64, 4
    $region21: #{tpu_custom_call.1} parent=1 // pred_fallthru
      _
    // Predicated region
    $region22: #{tpu_custom_call.1} parent=1 // pred_check
      _
    $region23: #{tpu_custom_call.1} parent=1 // pred_check_branch
      %76 = sbr.rel (0) target = $region25
    $region24: #{tpu_custom_call.1} parent=1 // pred_region
      _
    $region25: #{tpu_custom_call.1} parent=1 // pred_fallthru
      _
    // Predicated region
    $region26: #{tpu_custom_call.1} parent=1 // pred_check
      _
    $region27: #{tpu_custom_call.1} parent=1 // pred_check_branch
      %78 = sbr.rel (0) target = $region29
    $region28: #{tpu_custom_call.1} parent=1 // pred_region
      %79 = dma.done [#allocation3], 2048
    $region29: #{tpu_custom_call.1} parent=1 // pred_fallthru
      _
    // Predicated region
    $region30: #{tpu_custom_call.1} parent=1 // pred_check
      _
    $region31: #{tpu_custom_call.1} parent=1 // pred_check_branch
      %81 = sbr.rel (0) target = $region33
    $region32: #{tpu_custom_call.1} parent=1 // pred_region
      %82 = dma.done [#allocation6], 2048
    $region33: #{tpu_custom_call.1} parent=1 // pred_fallthru
      _
    // Predicated region
    $region34: #{tpu_custom_call.1} parent=1 // pred_check
      _
    $region35: #{tpu_custom_call.1} parent=1 // pred_check_branch
      %84 = sbr.rel (0) target = $region37
    $region36: #{tpu_custom_call.1} parent=1 // pred_region
      %85 = dma.done [#allocation6], 1024
    $region37: #{tpu_custom_call.1} parent=1 // pred_fallthru
      _
    // Predicated region
    $region38: #{tpu_custom_call.1} parent=1 // pred_check
      _
    $region39: #{tpu_custom_call.1} parent=1 // pred_check_branch
      %87 = sbr.rel (0) target = $region41
    $region40: #{tpu_custom_call.1} parent=1 // pred_region
      %88 = dma.done [#allocation9], 1024
    $region41: #{tpu_custom_call.1} parent=1 // pred_fallthru
      _
    // Predicated region
    $region42: #{tpu_custom_call.1} parent=1 // pred_check
      _
    $region43: #{tpu_custom_call.1} parent=1 // pred_check_branch
      %90 = sbr.rel (0) target = $region45
    $region44: #{tpu_custom_call.1} parent=1 // pred_region
      %91 = dma.done [#allocation9], 1024
    $region45: #{tpu_custom_call.1} parent=1 // pred_fallthru
      _
    %v93 = vld [vmem:[#allocation2] sm:$0xff]
    %v94 = vld [vmem:[#allocation2 + $0x8] sm:$0xff]
    %v95 = vld [vmem:[#allocation2 + $0x10] sm:$0xff]
    %v96 = vld [vmem:[#allocation2 + $0x18] sm:$0xff]
    %v97 = vld [vmem:[#allocation2 + $0x20] sm:$0xff]
    %v98 = vld [vmem:[#allocation2 + $0x28] sm:$0xff]
    %v99 = vld [vmem:[#allocation2 + $0x30] sm:$0xff]
    %v100 = vld [vmem:[#allocation2 + $0x38] sm:$0xff]
    %v101 = vld [vmem:[#allocation2 + $0x40] sm:$0xff]
    %v102 = vld [vmem:[#allocation2 + $0x48] sm:$0xff]
    %v103 = vld [vmem:[#allocation2 + $0x50] sm:$0xff]
    %v104 = vld [vmem:[#allocation2 + $0x58] sm:$0xff]
    %v105 = vld [vmem:[#allocation2 + $0x60] sm:$0xff]
    %v106 = vld [vmem:[#allocation2 + $0x68] sm:$0xff]
    %v107 = vld [vmem:[#allocation2 + $0x70] sm:$0xff]
    %v108 = vld [vmem:[#allocation2 + $0x78] sm:$0xff]
    %v109 = vpack.c.bf16 %v95, %v93
    %v110 = vpack.c.bf16 %v96, %v94
    %v111 = vpack.c.bf16 %v99, %v97
    %v112 = vpack.c.bf16 %v100, %v98
    %v113 = vpack.c.bf16 %v103, %v101
    %v114 = vpack.c.bf16 %v104, %v102
    %v115 = vpack.c.bf16 %v107, %v105
    %v116 = vpack.c.bf16 %v108, %v106
    %v117 = vld [vmem:[%s5] sm:$0xf]
    %v118 = vld [vmem:[#allocation5] sm:$0xf]
    %v119 = vld [vmem:[#allocation5 + $0x4] sm:$0xf]
    %v120 = vld [vmem:[#allocation5 + $0x8] sm:$0xf]
    %v121 = vld [vmem:[#allocation5 + $0xc] sm:$0xf]
    %v122 = vld [vmem:[#allocation5 + $0x10] sm:$0xf]
    %v123 = vld [vmem:[#allocation5 + $0x14] sm:$0xf]
    %v124 = vld [vmem:[#allocation5 + $0x18] sm:$0xf]
    %v125 = vld [vmem:[#allocation5 + $0x1c] sm:$0xf]
    %v126 = vld [vmem:[#allocation5 + $0x20] sm:$0xf]
    %v127 = vld [vmem:[#allocation5 + $0x24] sm:$0xf]
    %v128 = vld [vmem:[#allocation5 + $0x28] sm:$0xf]
    %v129 = vld [vmem:[#allocation5 + $0x2c] sm:$0xf]
    %v130 = vld [vmem:[#allocation5 + $0x30] sm:$0xf]
    %v131 = vld [vmem:[#allocation5 + $0x34] sm:$0xf]
    %v132 = vld [vmem:[#allocation5 + $0x38] sm:$0xf]
    %v133 = vld [vmem:[#allocation5 + $0x3c] sm:$0xf]
    %v134 = vld [vmem:[#allocation5 + $0x40] sm:$0xf]
    %v135 = vld [vmem:[#allocation5 + $0x44] sm:$0xf]
    %v136 = vld [vmem:[#allocation5 + $0x48] sm:$0xf]
    %v137 = vld [vmem:[#allocation5 + $0x4c] sm:$0xf]
    %v138 = vld [vmem:[#allocation5 + $0x50] sm:$0xf]
    %v139 = vld [vmem:[#allocation5 + $0x54] sm:$0xf]
    %v140 = vld [vmem:[#allocation5 + $0x58] sm:$0xf]
    %v141 = vld [vmem:[#allocation5 + $0x5c] sm:$0xf]
    %v142 = vld [vmem:[#allocation5 + $0x60] sm:$0xf]
    %v143 = vld [vmem:[#allocation5 + $0x64] sm:$0xf]
    %v144 = vld [vmem:[#allocation5 + $0x68] sm:$0xf]
    %v145 = vld [vmem:[#allocation5 + $0x6c] sm:$0xf]
    %v146 = vld [vmem:[#allocation5 + $0x70] sm:$0xf]
    %v147 = vld [vmem:[#allocation5 + $0x74] sm:$0xf]
    %v148 = vld [vmem:[#allocation5 + $0x78] sm:$0xf]
    %v149 = vld [vmem:[#allocation5 + $0x7c] sm:$0xf]
    %v150 = vlaneseq
    %v151 = vshrl.u32 %v150, 7
    %v152 = vsub.s32 0, %v151
    %v153 = vrot.slane %v117, %v152
    %v186 = vunpack.c.l.b16 %v118
    %v187 = vunpack.c.l.b16 %v119
    %v188 = vunpack.c.l.b16 %v120
    %v189 = vunpack.c.l.b16 %v121
    %v190 = vunpack.c.l.b16 %v122
    %v191 = vunpack.c.l.b16 %v123
    %v192 = vunpack.c.l.b16 %v124
    %v193 = vunpack.c.l.b16 %v125
    %v194 = vunpack.c.l.b16 %v126
    %v195 = vunpack.c.l.b16 %v127
    %v196 = vunpack.c.l.b16 %v128
    %v197 = vunpack.c.l.b16 %v129
    %v198 = vunpack.c.l.b16 %v130
    %v199 = vunpack.c.l.b16 %v131
    %v200 = vunpack.c.l.b16 %v132
    %v201 = vunpack.c.l.b16 %v133
    %v202 = vunpack.c.l.b16 %v134
    %v203 = vunpack.c.l.b16 %v135
    %v204 = vunpack.c.l.b16 %v136
    %v205 = vunpack.c.l.b16 %v137
    %v206 = vunpack.c.l.b16 %v138
    %v207 = vunpack.c.l.b16 %v139
    %v208 = vunpack.c.l.b16 %v140
    %v209 = vunpack.c.l.b16 %v141
    %v210 = vunpack.c.l.b16 %v142
    %v211 = vunpack.c.l.b16 %v143
    %v212 = vunpack.c.l.b16 %v144
    %v213 = vunpack.c.l.b16 %v145
    %v214 = vunpack.c.l.b16 %v146
    %v215 = vunpack.c.l.b16 %v147
    %v216 = vunpack.c.l.b16 %v148
    %v217 = vunpack.c.l.b16 %v149
    %v218 = vpack.c.b16 %v187, %v186
    %v219 = vpack.c.b16 %v189, %v188
    %v220 = vpack.c.b16 %v191, %v190
    %v221 = vpack.c.b16 %v193, %v192
    %v222 = vpack.c.b16 %v195, %v194
    %v223 = vpack.c.b16 %v197, %v196
    %v224 = vpack.c.b16 %v199, %v198
    %v225 = vpack.c.b16 %v201, %v200
    %v226 = vpack.c.b16 %v203, %v202
    %v227 = vpack.c.b16 %v205, %v204
    %v228 = vpack.c.b16 %v207, %v206
    %v229 = vpack.c.b16 %v209, %v208
    %v230 = vpack.c.b16 %v211, %v210
    %v231 = vpack.c.b16 %v213, %v212
    %v232 = vpack.c.b16 %v215, %v214
    %v233 = vpack.c.b16 %v217, %v216
    %250 = vmatprep.subr.bf16.mxu0 0
    %251 = vmatpush1.bf16.msra.mxu0 %v218
    %252 = vmatprep.subr.bf16.mxu0 0
    %253 = vmatpush1.bf16.msra.mxu0 %v219
    %254 = vmatprep.subr.bf16.mxu0 0
    %255 = vmatpush1.bf16.msra.mxu0 %v220
    %256 = vmatprep.subr.bf16.mxu0 0
    %257 = vmatpush1.bf16.msra.mxu0 %v221
    %258 = vmatprep.subr.bf16.mxu0 0
    %259 = vmatpush1.bf16.msra.mxu0 %v222
    %260 = vmatprep.subr.bf16.mxu0 0
    %261 = vmatpush1.bf16.msra.mxu0 %v223
    %262 = vmatprep.subr.bf16.mxu0 0
    %263 = vmatpush1.bf16.msra.mxu0 %v224
    %264 = vmatprep.subr.bf16.mxu0 0
    %265 = vmatpush1.bf16.msra.mxu0 %v225
    %266 = vmatprep.subr.bf16.mxu0 0
    %267 = vmatpush1.bf16.msra.mxu0 %v226
    %268 = vmatprep.subr.bf16.mxu0 0
    %269 = vmatpush1.bf16.msra.mxu0 %v227
    %270 = vmatprep.subr.bf16.mxu0 0
    %271 = vmatpush1.bf16.msra.mxu0 %v228
    %272 = vmatprep.subr.bf16.mxu0 0
    %273 = vmatpush1.bf16.msra.mxu0 %v229
    %274 = vmatprep.subr.bf16.mxu0 0
    %275 = vmatpush1.bf16.msra.mxu0 %v230
    %276 = vmatprep.subr.bf16.mxu0 0
    %277 = vmatpush1.bf16.msra.mxu0 %v231
    %278 = vmatprep.subr.bf16.mxu0 0
    %279 = vmatpush1.bf16.msra.mxu0 %v232
    %280 = vmatprep.subr.bf16.mxu0 0
    %281 = vmatpush1.bf16.msra.mxu0 %v233
    %282 = vmatprep.mubr.bf16.mxu0 %v110
    %283 = vmatmul.mubr.bf16.gmra.mrb[0].mxu0 %v109
    %v284 = vpop.f32.mrb[0].mxu0
    %v285 = vadd.f32 %v153, %v284
    %v286 = vpop.f32.mrb[0].mxu0
    %v287 = vpop.f32.mrb[0].mxu0
    %v288 = vadd.f32 %v153, %v287
    %v289 = vpop.f32.mrb[0].mxu0
    %290 = vmatprep.mubr.bf16.mxu0 %v112
    %291 = vmatmul.mubr.bf16.gmra.mrb[0].mxu0 %v111
    %v292 = vpop.f32.mrb[0].mxu0
    %v293 = vadd.f32 %v153, %v292
    %v294 = vpop.f32.mrb[0].mxu0
    %v295 = vpop.f32.mrb[0].mxu0
    %v296 = vadd.f32 %v153, %v295
    %v297 = vpop.f32.mrb[0].mxu0
    %298 = vmatprep.mubr.bf16.mxu0 %v114
    %299 = vmatmul.mubr.bf16.gmra.mrb[0].mxu0 %v113
    %v300 = vpop.f32.mrb[0].mxu0
    %v301 = vadd.f32 %v153, %v300
    %v302 = vpop.f32.mrb[0].mxu0
    %v303 = vpop.f32.mrb[0].mxu0
    %v304 = vadd.f32 %v153, %v303
    %v305 = vpop.f32.mrb[0].mxu0
    %306 = vmatprep.mubr.bf16.mxu0 %v116
    %307 = vmatmul.mubr.bf16.gmra.mrb[0].mxu0 %v115
    %v308 = vpop.f32.mrb[0].mxu0
    %v309 = vadd.f32 %v153, %v308
    %v310 = vpop.f32.mrb[0].mxu0
    %v311 = vpop.f32.mrb[0].mxu0
    %v312 = vadd.f32 %v153, %v311
    %v313 = vpop.f32.mrb[0].mxu0
    %314 = vdwg.mxu0
    %v315 = vmax.f32 %v285, 0.0
    %v316 = vmax.f32 %v288, 0.0
    %v317 = vmax.f32 %v293, 0.0
    %v318 = vmax.f32 %v296, 0.0
    %v319 = vmax.f32 %v301, 0.0
    %v320 = vmax.f32 %v304, 0.0
    %v321 = vmax.f32 %v309, 0.0
    %v322 = vmax.f32 %v312, 0.0
    %v323 = vpack.c.bf16 %v316, %v315
    %v324 = vpack.c.bf16 %v318, %v317
    %v325 = vpack.c.bf16 %v320, %v319
    %v326 = vpack.c.bf16 %v322, %v321
    %v327 = vld [vmem:[#allocation7] sm:$0xf]
    %v328 = vld [vmem:[#allocation7 + $0x4] sm:$0xf]
    %v329 = vld [vmem:[#allocation7 + $0x8] sm:$0xf]
    %v330 = vld [vmem:[#allocation7 + $0xc] sm:$0xf]
    %v331 = vld [vmem:[#allocation7 + $0x10] sm:$0xf]
    %v332 = vld [vmem:[#allocation7 + $0x14] sm:$0xf]
    %v333 = vld [vmem:[#allocation7 + $0x18] sm:$0xf]
    %v334 = vld [vmem:[#allocation7 + $0x1c] sm:$0xf]
    %v335 = vld [vmem:[#allocation7 + $0x20] sm:$0xf]
    %v336 = vld [vmem:[#allocation7 + $0x24] sm:$0xf]
    %v337 = vld [vmem:[#allocation7 + $0x28] sm:$0xf]
    %v338 = vld [vmem:[#allocation7 + $0x2c] sm:$0xf]
    %v339 = vld [vmem:[#allocation7 + $0x30] sm:$0xf]
    %v340 = vld [vmem:[#allocation7 + $0x34] sm:$0xf]
    %v341 = vld [vmem:[#allocation7 + $0x38] sm:$0xf]
    %v342 = vld [vmem:[#allocation7 + $0x3c] sm:$0xf]
    %v343 = vlaneseq
    %v344 = vshrl.u32 %v343, 7
    %v345 = vsub.s32 1, %v344
    %v346 = vrot.slane %v117, %v345
    %v363 = vunpack.c.l.b16 %v327
    %v364 = vunpack.c.l.b16 %v328
    %v365 = vunpack.c.l.b16 %v329
    %v366 = vunpack.c.l.b16 %v330
    %v367 = vunpack.c.l.b16 %v331
    %v368 = vunpack.c.l.b16 %v332
    %v369 = vunpack.c.l.b16 %v333
    %v370 = vunpack.c.l.b16 %v334
    %v371 = vunpack.c.l.b16 %v335
    %v372 = vunpack.c.l.b16 %v336
    %v373 = vunpack.c.l.b16 %v337
    %v374 = vunpack.c.l.b16 %v338
    %v375 = vunpack.c.l.b16 %v339
    %v376 = vunpack.c.l.b16 %v340
    %v377 = vunpack.c.l.b16 %v341
    %v378 = vunpack.c.l.b16 %v342
    %v379 = vpack.c.b16 %v364, %v363
    %v380 = vpack.c.b16 %v366, %v365
    %v381 = vpack.c.b16 %v368, %v367
    %v382 = vpack.c.b16 %v370, %v369
    %v383 = vpack.c.b16 %v372, %v371
    %v384 = vpack.c.b16 %v374, %v373
    %v385 = vpack.c.b16 %v376, %v375
    %v386 = vpack.c.b16 %v378, %v377
    %395 = vmatprep.subr.bf16.mxu0 0
    %396 = vmatpush1.bf16.msra.mxu0 %v379
    %397 = vmatprep.subr.bf16.mxu0 0
    %398 = vmatpush1.bf16.msra.mxu0 %v380
    %399 = vmatprep.subr.bf16.mxu0 0
    %400 = vmatpush1.bf16.msra.mxu0 %v381
    %401 = vmatprep.subr.bf16.mxu0 0
    %402 = vmatpush1.bf16.msra.mxu0 %v382
    %403 = vmatprep.subr.bf16.mxu0 0
    %404 = vmatpush1.bf16.msra.mxu0 %v383
    %405 = vmatprep.subr.bf16.mxu0 0
    %406 = vmatpush1.bf16.msra.mxu0 %v384
    %407 = vmatprep.subr.bf16.mxu0 0
    %408 = vmatpush1.bf16.msra.mxu0 %v385
    %409 = vmatprep.subr.bf16.mxu0 0
    %410 = vmatpush1.bf16.msra.mxu0 %v386
    %411 = vmatprep.subr.bf16.mxu0 0
    %412 = vmatpush1.bf16.msra.mxu0 0
    %413 = vmatprep.subr.bf16.mxu0 0
    %414 = vmatpush1.bf16.msra.mxu0 0
    %415 = vmatprep.subr.bf16.mxu0 0
    %416 = vmatpush1.bf16.msra.mxu0 0
    %417 = vmatprep.subr.bf16.mxu0 0
    %418 = vmatpush1.bf16.msra.mxu0 0
    %419 = vmatprep.subr.bf16.mxu0 0
    %420 = vmatpush1.bf16.msra.mxu0 0
    %421 = vmatprep.subr.bf16.mxu0 0
    %422 = vmatpush1.bf16.msra.mxu0 0
    %423 = vmatprep.subr.bf16.mxu0 0
    %424 = vmatpush1.bf16.msra.mxu0 0
    %425 = vmatprep.subr.bf16.mxu0 0
    %426 = vmatpush1.bf16.msra.mxu0 0
    %427 = vmatprep.mubr.bf16.mxu0 0
    %428 = vmatmul.mubr.bf16.gmra.mrb[0].mxu0 %v323
    %v429 = vpop.f32.mrb[0].mxu0
    %v430 = vadd.f32 %v346, %v429
    %v431 = vpop.f32.mrb[0].mxu0
    %v432 = vpop.f32.mrb[0].mxu0
    %v433 = vadd.f32 %v346, %v432
    %v434 = vpop.f32.mrb[0].mxu0
    %435 = vmatprep.mubr.bf16.mxu0 0
    %436 = vmatmul.mubr.bf16.gmra.mrb[0].mxu0 %v324
    %v437 = vpop.f32.mrb[0].mxu0
    %v438 = vadd.f32 %v346, %v437
    %v439 = vpop.f32.mrb[0].mxu0
    %v440 = vpop.f32.mrb[0].mxu0
    %v441 = vadd.f32 %v346, %v440
    %v442 = vpop.f32.mrb[0].mxu0
    %443 = vmatprep.mubr.bf16.mxu0 0
    %444 = vmatmul.mubr.bf16.gmra.mrb[0].mxu0 %v325
    %v445 = vpop.f32.mrb[0].mxu0
    %v446 = vadd.f32 %v346, %v445
    %v447 = vpop.f32.mrb[0].mxu0
    %v448 = vpop.f32.mrb[0].mxu0
    %v449 = vadd.f32 %v346, %v448
    %v450 = vpop.f32.mrb[0].mxu0
    %451 = vmatprep.mubr.bf16.mxu0 0
    %452 = vmatmul.mubr.bf16.gmra.mrb[0].mxu0 %v326
    %v453 = vpop.f32.mrb[0].mxu0
    %v454 = vadd.f32 %v346, %v453
    %v455 = vpop.f32.mrb[0].mxu0
    %v456 = vpop.f32.mrb[0].mxu0
    %v457 = vadd.f32 %v346, %v456
    %v458 = vpop.f32.mrb[0].mxu0
    %459 = vdwg.mxu0
    %v460 = vmax.f32 %v430, 0.0
    %v461 = vmax.f32 %v433, 0.0
    %v462 = vmax.f32 %v438, 0.0
    %v463 = vmax.f32 %v441, 0.0
    %v464 = vmax.f32 %v446, 0.0
    %v465 = vmax.f32 %v449, 0.0
    %v466 = vmax.f32 %v454, 0.0
    %v467 = vmax.f32 %v457, 0.0
    %v468 = vpack.c.bf16 %v461, %v460
    %v469 = vpack.c.bf16 %v463, %v462
    %v470 = vpack.c.bf16 %v465, %v464
    %v471 = vpack.c.bf16 %v467, %v466
    %v472 = vld [vmem:[#allocation8] sm:$0xf]
    %v473 = vld [vmem:[#allocation8 + $0x4] sm:$0xf]
    %v474 = vld [vmem:[#allocation8 + $0x8] sm:$0xf]
    %v475 = vld [vmem:[#allocation8 + $0xc] sm:$0xf]
    %v476 = vld [vmem:[#allocation8 + $0x10] sm:$0xf]
    %v477 = vld [vmem:[#allocation8 + $0x14] sm:$0xf]
    %v478 = vld [vmem:[#allocation8 + $0x18] sm:$0xf]
    %v479 = vld [vmem:[#allocation8 + $0x1c] sm:$0xf]
    %v480 = vld [vmem:[#allocation8 + $0x20] sm:$0xf]
    %v481 = vld [vmem:[#allocation8 + $0x24] sm:$0xf]
    %v482 = vld [vmem:[#allocation8 + $0x28] sm:$0xf]
    %v483 = vld [vmem:[#allocation8 + $0x2c] sm:$0xf]
    %v484 = vld [vmem:[#allocation8 + $0x30] sm:$0xf]
    %v485 = vld [vmem:[#allocation8 + $0x34] sm:$0xf]
    %v486 = vld [vmem:[#allocation8 + $0x38] sm:$0xf]
    %v487 = vld [vmem:[#allocation8 + $0x3c] sm:$0xf]
    %v488 = vlaneseq
    %v489 = vshrl.u32 %v488, 7
    %v490 = vsub.s32 2, %v489
    %v491 = vrot.slane %v117, %v490
    %v508 = vunpack.c.l.b16 %v472
    %v509 = vunpack.c.l.b16 %v473
    %v510 = vunpack.c.l.b16 %v474
    %v511 = vunpack.c.l.b16 %v475
    %v512 = vunpack.c.l.b16 %v476
    %v513 = vunpack.c.l.b16 %v477
    %v514 = vunpack.c.l.b16 %v478
    %v515 = vunpack.c.l.b16 %v479
    %v516 = vunpack.c.l.b16 %v480
    %v517 = vunpack.c.l.b16 %v481
    %v518 = vunpack.c.l.b16 %v482
    %v519 = vunpack.c.l.b16 %v483
    %v520 = vunpack.c.l.b16 %v484
    %v521 = vunpack.c.l.b16 %v485
    %v522 = vunpack.c.l.b16 %v486
    %v523 = vunpack.c.l.b16 %v487
    %v524 = vpack.c.b16 %v509, %v508
    %v525 = vpack.c.b16 %v511, %v510
    %v526 = vpack.c.b16 %v513, %v512
    %v527 = vpack.c.b16 %v515, %v514
    %v528 = vpack.c.b16 %v517, %v516
    %v529 = vpack.c.b16 %v519, %v518
    %v530 = vpack.c.b16 %v521, %v520
    %v531 = vpack.c.b16 %v523, %v522
    %540 = vmatprep.subr.bf16.mxu0 0
    %541 = vmatpush1.bf16.msra.mxu0 %v524
    %542 = vmatprep.subr.bf16.mxu0 0
    %543 = vmatpush1.bf16.msra.mxu0 %v525
    %544 = vmatprep.subr.bf16.mxu0 0
    %545 = vmatpush1.bf16.msra.mxu0 %v526
    %546 = vmatprep.subr.bf16.mxu0 0
    %547 = vmatpush1.bf16.msra.mxu0 %v527
    %548 = vmatprep.subr.bf16.mxu0 0
    %549 = vmatpush1.bf16.msra.mxu0 %v528
    %550 = vmatprep.subr.bf16.mxu0 0
    %551 = vmatpush1.bf16.msra.mxu0 %v529
    %552 = vmatprep.subr.bf16.mxu0 0
    %553 = vmatpush1.bf16.msra.mxu0 %v530
    %554 = vmatprep.subr.bf16.mxu0 0
    %555 = vmatpush1.bf16.msra.mxu0 %v531
    %556 = vmatprep.subr.bf16.mxu0 0
    %557 = vmatpush1.bf16.msra.mxu0 0
    %558 = vmatprep.subr.bf16.mxu0 0
    %559 = vmatpush1.bf16.msra.mxu0 0
    %560 = vmatprep.subr.bf16.mxu0 0
    %561 = vmatpush1.bf16.msra.mxu0 0
    %562 = vmatprep.subr.bf16.mxu0 0
    %563 = vmatpush1.bf16.msra.mxu0 0
    %564 = vmatprep.subr.bf16.mxu0 0
    %565 = vmatpush1.bf16.msra.mxu0 0
    %566 = vmatprep.subr.bf16.mxu0 0
    %567 = vmatpush1.bf16.msra.mxu0 0
    %568 = vmatprep.subr.bf16.mxu0 0
    %569 = vmatpush1.bf16.msra.mxu0 0
    %570 = vmatprep.subr.bf16.mxu0 0
    %571 = vmatpush1.bf16.msra.mxu0 0
    %572 = vmatprep.mubr.bf16.mxu0 0
    %573 = vmatmul.mubr.bf16.gmra.mrb[0].mxu0 %v468
    %v574 = vpop.f32.mrb[0].mxu0
    %v575 = vadd.f32 %v491, %v574
    %v576 = vpop.f32.mrb[0].mxu0
    %v577 = vpop.f32.mrb[0].mxu0
    %v578 = vadd.f32 %v491, %v577
    %v579 = vpop.f32.mrb[0].mxu0
    %580 = vmatprep.mubr.bf16.mxu0 0
    %581 = vmatmul.mubr.bf16.gmra.mrb[0].mxu0 %v469
    %v582 = vpop.f32.mrb[0].mxu0
    %v583 = vadd.f32 %v491, %v582
    %v584 = vpop.f32.mrb[0].mxu0
    %v585 = vpop.f32.mrb[0].mxu0
    %v586 = vadd.f32 %v491, %v585
    %v587 = vpop.f32.mrb[0].mxu0
    %588 = vmatprep.mubr.bf16.mxu0 0
    %589 = vmatmul.mubr.bf16.gmra.mrb[0].mxu0 %v470
    %v590 = vpop.f32.mrb[0].mxu0
    %v591 = vadd.f32 %v491, %v590
    %v592 = vpop.f32.mrb[0].mxu0
    %v593 = vpop.f32.mrb[0].mxu0
    %v594 = vadd.f32 %v491, %v593
    %v595 = vpop.f32.mrb[0].mxu0
    %596 = vmatprep.mubr.bf16.mxu0 0
    %597 = vmatmul.mubr.bf16.gmra.mrb[0].mxu0 %v471
    %v598 = vpop.f32.mrb[0].mxu0
    %v599 = vadd.f32 %v491, %v598
    %v600 = vpop.f32.mrb[0].mxu0
    %v601 = vpop.f32.mrb[0].mxu0
    %v602 = vadd.f32 %v491, %v601
    %v603 = vpop.f32.mrb[0].mxu0
    %604 = vdwg.mxu0
    %v605 = vmax.f32 %v575, 0.0
    %v606 = vmax.f32 %v578, 0.0
    %v607 = vmax.f32 %v583, 0.0
    %v608 = vmax.f32 %v586, 0.0
    %v609 = vmax.f32 %v591, 0.0
    %v610 = vmax.f32 %v594, 0.0
    %v611 = vmax.f32 %v599, 0.0
    %v612 = vmax.f32 %v602, 0.0
    %v613 = vpack.c.bf16 %v606, %v605
    %v614 = vpack.c.bf16 %v608, %v607
    %v615 = vpack.c.bf16 %v610, %v609
    %v616 = vpack.c.bf16 %v612, %v611
    %v617 = vld [vmem:[#allocation10] sm:$0xf]
    %v618 = vld [vmem:[#allocation10 + $0x4] sm:$0xf]
    %v619 = vld [vmem:[#allocation10 + $0x8] sm:$0xf]
    %v620 = vld [vmem:[#allocation10 + $0xc] sm:$0xf]
    %v621 = vld [vmem:[#allocation10 + $0x10] sm:$0xf]
    %v622 = vld [vmem:[#allocation10 + $0x14] sm:$0xf]
    %v623 = vld [vmem:[#allocation10 + $0x18] sm:$0xf]
    %v624 = vld [vmem:[#allocation10 + $0x1c] sm:$0xf]
    %v625 = vld [vmem:[#allocation10 + $0x20] sm:$0xf]
    %v626 = vld [vmem:[#allocation10 + $0x24] sm:$0xf]
    %v627 = vld [vmem:[#allocation10 + $0x28] sm:$0xf]
    %v628 = vld [vmem:[#allocation10 + $0x2c] sm:$0xf]
    %v629 = vld [vmem:[#allocation10 + $0x30] sm:$0xf]
    %v630 = vld [vmem:[#allocation10 + $0x34] sm:$0xf]
    %v631 = vld [vmem:[#allocation10 + $0x38] sm:$0xf]
    %v632 = vld [vmem:[#allocation10 + $0x3c] sm:$0xf]
    %v633 = vlaneseq
    %v634 = vshrl.u32 %v633, 7
    %v635 = vsub.s32 3, %v634
    %v636 = vrot.slane %v117, %v635
    %v653 = vunpack.c.l.b16 %v617
    %v654 = vunpack.c.l.b16 %v618
    %v655 = vunpack.c.l.b16 %v619
    %v656 = vunpack.c.l.b16 %v620
    %v657 = vunpack.c.l.b16 %v621
    %v658 = vunpack.c.l.b16 %v622
    %v659 = vunpack.c.l.b16 %v623
    %v660 = vunpack.c.l.b16 %v624
    %v661 = vunpack.c.l.b16 %v625
    %v662 = vunpack.c.l.b16 %v626
    %v663 = vunpack.c.l.b16 %v627
    %v664 = vunpack.c.l.b16 %v628
    %v665 = vunpack.c.l.b16 %v629
    %v666 = vunpack.c.l.b16 %v630
    %v667 = vunpack.c.l.b16 %v631
    %v668 = vunpack.c.l.b16 %v632
    %v669 = vpack.c.b16 %v654, %v653
    %v670 = vpack.c.b16 %v656, %v655
    %v671 = vpack.c.b16 %v658, %v657
    %v672 = vpack.c.b16 %v660, %v659
    %v673 = vpack.c.b16 %v662, %v661
    %v674 = vpack.c.b16 %v664, %v663
    %v675 = vpack.c.b16 %v666, %v665
    %v676 = vpack.c.b16 %v668, %v667
    %685 = vmatprep.subr.bf16.mxu0 0
    %686 = vmatpush1.bf16.msra.mxu0 %v669
    %687 = vmatprep.subr.bf16.mxu0 0
    %688 = vmatpush1.bf16.msra.mxu0 %v670
    %689 = vmatprep.subr.bf16.mxu0 0
    %690 = vmatpush1.bf16.msra.mxu0 %v671
    %691 = vmatprep.subr.bf16.mxu0 0
    %692 = vmatpush1.bf16.msra.mxu0 %v672
    %693 = vmatprep.subr.bf16.mxu0 0
    %694 = vmatpush1.bf16.msra.mxu0 %v673
    %695 = vmatprep.subr.bf16.mxu0 0
    %696 = vmatpush1.bf16.msra.mxu0 %v674
    %697 = vmatprep.subr.bf16.mxu0 0
    %698 = vmatpush1.bf16.msra.mxu0 %v675
    %699 = vmatprep.subr.bf16.mxu0 0
    %700 = vmatpush1.bf16.msra.mxu0 %v676
    %701 = vmatprep.subr.bf16.mxu0 0
    %702 = vmatpush1.bf16.msra.mxu0 0
    %703 = vmatprep.subr.bf16.mxu0 0
    %704 = vmatpush1.bf16.msra.mxu0 0
    %705 = vmatprep.subr.bf16.mxu0 0
    %706 = vmatpush1.bf16.msra.mxu0 0
    %707 = vmatprep.subr.bf16.mxu0 0
    %708 = vmatpush1.bf16.msra.mxu0 0
    %709 = vmatprep.subr.bf16.mxu0 0
    %710 = vmatpush1.bf16.msra.mxu0 0
    %711 = vmatprep.subr.bf16.mxu0 0
    %712 = vmatpush1.bf16.msra.mxu0 0
    %713 = vmatprep.subr.bf16.mxu0 0
    %714 = vmatpush1.bf16.msra.mxu0 0
    %715 = vmatprep.subr.bf16.mxu0 0
    %716 = vmatpush1.bf16.msra.mxu0 0
    %717 = vmatprep.mubr.bf16.mxu0 0
    %718 = vmatmul.mubr.bf16.gmra.mrb[0].mxu0 %v613
    %v719 = vpop.f32.mrb[0].mxu0
    %v720 = vadd.f32 %v636, %v719
    %v721 = vpop.f32.mrb[0].mxu0
    %v722 = vpop.f32.mrb[0].mxu0
    %v723 = vadd.f32 %v636, %v722
    %v724 = vpop.f32.mrb[0].mxu0
    %725 = vmatprep.mubr.bf16.mxu0 0
    %726 = vmatmul.mubr.bf16.gmra.mrb[0].mxu0 %v614
    %v727 = vpop.f32.mrb[0].mxu0
    %v728 = vadd.f32 %v636, %v727
    %v729 = vpop.f32.mrb[0].mxu0
    %v730 = vpop.f32.mrb[0].mxu0
    %v731 = vadd.f32 %v636, %v730
    %v732 = vpop.f32.mrb[0].mxu0
    %733 = vmatprep.mubr.bf16.mxu0 0
    %734 = vmatmul.mubr.bf16.gmra.mrb[0].mxu0 %v615
    %v735 = vpop.f32.mrb[0].mxu0
    %v736 = vadd.f32 %v636, %v735
    %v737 = vpop.f32.mrb[0].mxu0
    %v738 = vpop.f32.mrb[0].mxu0
    %v739 = vadd.f32 %v636, %v738
    %v740 = vpop.f32.mrb[0].mxu0
    %741 = vmatprep.mubr.bf16.mxu0 0
    %742 = vmatmul.mubr.bf16.gmra.mrb[0].mxu0 %v616
    %v743 = vpop.f32.mrb[0].mxu0
    %v744 = vadd.f32 %v636, %v743
    %v745 = vpop.f32.mrb[0].mxu0
    %v746 = vpop.f32.mrb[0].mxu0
    %v747 = vadd.f32 %v636, %v746
    %v748 = vpop.f32.mrb[0].mxu0
    %749 = vdwg.mxu0
    %750 = vst [vmem:[#allocation11] sm:$0xff] %v720
    %751 = vst [vmem:[#allocation11 + $0x8] sm:$0xff] %v723
    %752 = vst [vmem:[#allocation11 + $0x10] sm:$0xff] %v728
    %753 = vst [vmem:[#allocation11 + $0x18] sm:$0xff] %v731
    %754 = vst [vmem:[#allocation11 + $0x20] sm:$0xff] %v736
    %755 = vst [vmem:[#allocation11 + $0x28] sm:$0xff] %v739
    %756 = vst [vmem:[#allocation11 + $0x30] sm:$0xff] %v744
    %757 = vst [vmem:[#allocation11 + $0x38] sm:$0xff] %v747
    // Predicated region
    $region46: #{tpu_custom_call.1} parent=1 // pred_check
      _
    $region47: #{tpu_custom_call.1} parent=1 // pred_check_branch
      %759 = sbr.rel (0) target = $region49
    $region48: #{tpu_custom_call.1} parent=1 // pred_region
      %s761 = ssub.s32 1024, 1024
      %762 = vsyncadd [#allocation4], %s761
      %s763 = sshll.u32 [#allocation11], 4
      %s764 = int_to_ptr.vmem [resolvable:$true] %s763
      %769 = dma.vmem_to_hbm [thread:$0]  %s764, 1024, %s6, [#allocation4], 128, 128, 8
    $region49: #{tpu_custom_call.1} parent=1 // pred_fallthru
      _
    // Predicated region
    $region50: #{tpu_custom_call.1} parent=1 // pred_check
      _
    $region51: #{tpu_custom_call.1} parent=1 // pred_check_branch
      %771 = sbr.rel (0) target = $region53
    $region52: #{tpu_custom_call.1} parent=1 // pred_region
      %772 = dma.done [#allocation4], 1024
    $region53: #{tpu_custom_call.1} parent=1 // pred_fallthru
      _
    %773 = vsyncpa [#allocation3], 1
    %774 = vsyncpa [#allocation6], 1
    %775 = vsyncpa [#allocation9], 1
    %776 = vsyncpa [#allocation4], 1

</llo_original>
